<compile_context>
chip_gen: v7x
topology: tpu7x:2x2x1
jax: 0.10.0
libtpu: 0.0.40
codegen_flags: <defaults>
</compile_context>

<pallas_src>
import jax
import jax.numpy as jnp
from jax import lax
from jax.experimental import pallas as pl
from jax.experimental.pallas import tpu as pltpu

_LANES = 128
_SUBLANES = 8
# 2048 rows x 128 lanes x 4 B = 1 MiB per f32 input buffer; 3 inputs x 2 pipeline
# buffers = 6 MiB (+ elementwise temporaries), comfortably inside the 32 MiB
# vmem_limit_bytes requested below on v5e / v6e / v7x.
_TILE_ROWS = 2048
# Below this many elements the fused XLA reduction beats kernel-launch overhead.
_MIN_KERNEL_ELEMENTS = 512 * 1024
# Only split rows across two TensorCores when there are enough tiles that any
# (at most one) redundant clamped tile is a small fraction of the traffic.
_MIN_TILES_FOR_SPLIT = 8


def _round_up(x, m):
    return ((x + m - 1) // m) * m


def _softplus_beta1_threshold1(x):
    # nn.Softplus(beta=1, threshold=1): identity when x > 1, else log1p(exp(x)).
    # Clamp before exp so the untaken branch never produces a spurious inf.
    return jnp.where(x > 1.0, x, jnp.log1p(jnp.exp(jnp.minimum(x, 1.0))))


def _reference(anchor, positive, negative):
    """Pure-JAX reference (also the fast path for tiny embeddings)."""
    a = anchor.astype(jnp.float32)
    p = positive.astype(jnp.float32)
    n = negative.astype(jnp.float32)
    dp = jnp.sqrt(jnp.sum(jnp.square(a - p)))
    dn = jnp.sqrt(jnp.sum(jnp.square(a - n)))
    return _softplus_beta1_threshold1(dp - dn)


def _make_kernel(rows, tile_rows, tiles_per_split, needs_mask):
    chunked = (tile_rows % _SUBLANES == 0)
    groups = tile_rows // _SUBLANES

    def kernel(a_ref, p_ref, n_ref, o_ref):
        c = pl.program_id(0)          # TensorCore split  ("parallel")
        i = pl.program_id(1)          # row-tile step     ("arbitrary" reduction)

        @pl.when(i == 0)
        def _init():
            o_ref[...] = jnp.zeros_like(o_ref)

        a = a_ref[...].astype(jnp.float32)
        dp = a - p_ref[...].astype(jnp.float32)
        dn = a - n_ref[...].astype(jnp.float32)
        sp = dp * dp
        sn = dn * dn

        if needs_mask:
            # Edge tiles (and clamped redundant tiles) contain unspecified rows
            # beyond the array: zero them.  `limit <= 0` masks a whole tile.
            start = (c * tiles_per_split + i) * tile_rows
            limit = rows - start
            row_ids = lax.broadcasted_iota(jnp.int32, (tile_rows, _LANES), 0)
            valid = row_ids < limit
            sp = jnp.where(valid, sp, 0.0)
            sn = jnp.where(valid, sn, 0.0)

        if chunked:
            # Sublane-chunked partial sums: (tile_rows, 128) -> (8, 128) with
            # pure VPU adds; no cross-lane XLU reduce or vector->scalar domain
            # crossing in the steady state.
            o_ref[0, 0] += jnp.sum(sp.reshape(groups, _SUBLANES, _LANES), axis=0)
            o_ref[0, 1] += jnp.sum(sn.reshape(groups, _SUBLANES, _LANES), axis=0)
        else:
            # Tiny single-block case (tile_rows == rows, not 8-aligned).
            o_ref[0, 0, 0:1, :] += jnp.sum(sp, axis=0, keepdims=True)
            o_ref[0, 1, 0:1, :] += jnp.sum(sn, axis=0, keepdims=True)

    return kernel


def _pallas_sq_dists(a2, p2, n2, *, max_tile_rows=_TILE_ROWS):
    """a2/p2/n2 are (rows, 128) views.  Returns (dp_sq, dn_sq) as f32 scalars."""
    rows = a2.shape[0]

    if rows <= max_tile_rows:
        tile_rows, num_splits = rows, 1
    else:
        n_tiles = pl.cdiv(rows, max_tile_rows)
        num_splits = 2 if n_tiles >= _MIN_TILES_FOR_SPLIT else 1
        if num_splits == 2 and n_tiles % 2:
            n_tiles += 1                 # equal per-core work, no redundant tile
        tile_rows = _round_up(pl.cdiv(rows, n_tiles), _SUBLANES)

    total_tiles = pl.cdiv(rows, tile_rows)
    tiles_per_split = pl.cdiv(total_tiles, num_splits)
    needs_mask = (num_splits * tiles_per_split * tile_rows != rows)

    def in_map(c, i):
        # Clamp so a (rare) redundant step re-reads an in-bounds tile; its
        # contribution is zeroed by the in-kernel row mask.
        return (jnp.minimum(c * tiles_per_split + i, total_tiles - 1), 0)

    in_spec = pl.BlockSpec((tile_rows, _LANES), in_map)
    out_spec = pl.BlockSpec((1, 2, _SUBLANES, _LANES), lambda c, i: (c, 0, 0, 0))

    acc = pl.pallas_call(
        _make_kernel(rows, tile_rows, tiles_per_split, needs_mask),
        out_shape=jax.ShapeDtypeStruct((num_splits, 2, _SUBLANES, _LANES),
                                       jnp.float32),
        grid=(num_splits, tiles_per_split),
        in_specs=[in_spec, in_spec, in_spec],
        out_specs=out_spec,
        compiler_params=pltpu.CompilerParams(
            dimension_semantics=("parallel", "arbitrary"),
            vmem_limit_bytes=32 * 1024 * 1024),
    )(a2, p2, n2)

    # Tiny (num_splits, 2, 8, 128) partials -> scalars; fuses with the epilogue.
    return jnp.sum(acc[:, 0]), jnp.sum(acc[:, 1])


def softplus_triplet_loss(anchor, positive, negative, *, use_pallas=None,
                          max_tile_rows=_TILE_ROWS):
    """Scalar f32 loss, same value as the PyTorch module's forward()."""
    d = anchor.size
    rows = d // _LANES
    if use_pallas is None:
        use_pallas = d >= _MIN_KERNEL_ELEMENTS
    if not use_pallas or rows == 0:
        return _reference(anchor, positive, negative)

    lane_tail = d - rows * _LANES
    if lane_tail == 0:
        # Free bitcast; no HBM copy.
        a2, p2, n2 = (x.reshape(rows, _LANES) for x in (anchor, positive, negative))
        tail_dp = tail_dn = jnp.float32(0.0)
    else:
        # numel % 128 != 0: the kernel covers the 128-aligned prefix and the
        # < 128-element tail folds into the scalar epilogue.  (The prefix slice
        # does materialize one copy; multiple-of-128 sizes avoid it entirely.)
        a_f, p_f, n_f = (x.reshape(-1) for x in (anchor, positive, negative))
        split = rows * _LANES
        a2, p2, n2 = (x[:split].reshape(rows, _LANES) for x in (a_f, p_f, n_f))
        at, pt, nt = (x[split:].astype(jnp.float32) for x in (a_f, p_f, n_f))
        tail_dp = jnp.sum(jnp.square(at - pt))
        tail_dn = jnp.sum(jnp.square(at - nt))

    dp_sq, dn_sq = _pallas_sq_dists(a2, p2, n2, max_tile_rows=max_tile_rows)
    dp = jnp.sqrt(dp_sq + tail_dp)
    dn = jnp.sqrt(dn_sq + tail_dn)
    return _softplus_beta1_threshold1(dp - dn)


if __name__ == "__main__":
    key = jax.random.PRNGKey(0)
    ka, kp, kn = jax.random.split(key, 3)

    def make(n, dtype=jnp.float32):
        a = jax.random.normal(ka, (n,), jnp.float32).astype(dtype)
        p = jax.random.normal(kp, (n,), jnp.float32).astype(dtype)
        q = jax.random.normal(kn, (n,), jnp.float32).astype(dtype)
        return a, p, q

    # Case 1: unaligned length; a small max_tile_rows exercises the whole
    # machinery at a small size: grid (2, 5), two-core split, masked edge tile
    # and the < 128-element lane-tail epilogue.
    a, p, n = make(520 * 128 + 37)
    loss = jax.block_until_ready(
        softplus_triplet_loss(a, p, n, use_pallas=True, max_tile_rows=64))
    ref = _reference(a, p, n)
    assert jnp.allclose(loss, ref, rtol=1e-2, atol=1e-2), (loss, ref)

    # Case 2: bf16 inputs travel over HBM as bf16 and are upcast in-kernel.
    a16, p16, n16 = (x.astype(jnp.bfloat16) for x in (a, p, n))
    loss16 = jax.block_until_ready(
        softplus_triplet_loss(a16, p16, n16, use_pallas=True, max_tile_rows=64))
    ref16 = _reference(a16, p16, n16)
    assert jnp.allclose(loss16, ref16, rtol=2e-2, atol=2e-2), (loss16, ref16)

    # Case 3: small aligned embedding, single (rows, 128) block with rows not a
    # multiple of 8 (exercises the non-chunked accumulation path).
    a3, p3, n3 = make(13 * 128)
    loss3 = jax.block_until_ready(
        softplus_triplet_loss(a3, p3, n3, use_pallas=True))
    ref3 = _reference(a3, p3, n3)
    assert jnp.allclose(loss3, ref3, rtol=1e-3, atol=1e-3), (loss3, ref3)

    # Case 4: tiny embedding -> auto-dispatch to the fused pure-JAX path.
    a4, p4, n4 = make(32)
    loss4 = jax.block_until_ready(softplus_triplet_loss(a4, p4, n4))
    ref4 = _reference(a4, p4, n4)
    assert jnp.allclose(loss4, ref4, rtol=1e-5, atol=1e-6), (loss4, ref4)

    print("KERNEL_OK")
</pallas_src>

<mosaic_0001>
module attributes {stable_mosaic.version = 11 : i64} {
  func.func @kernel(%arg0: i32, %arg1: i32, %arg2: memref<56x128xf32, #tpu.memory_space<vmem>>, %arg3: memref<56x128xf32, #tpu.memory_space<vmem>>, %arg4: memref<56x128xf32, #tpu.memory_space<vmem>>, %arg5: memref<1x2x8x128xf32, #tpu.memory_space<vmem>>) attributes {dimension_semantics = [#tpu.dimension_semantics<parallel>, #tpu.dimension_semantics<arbitrary>], iteration_bounds = array<i64: 2, 5>, scalar_prefetch = 0 : i64, scratch_operands = 0 : i64, tpu.core_type = #tpu.core_type<tc>, window_params = [{transform_indices = @transform_0, window_bounds = array<i64: 56, 128>}, {transform_indices = @transform_1, window_bounds = array<i64: 56, 128>}, {transform_indices = @transform_2, window_bounds = array<i64: 56, 128>}, {transform_indices = @transform_3, window_bounds = array<i64: 1, 2, 8, 128>}]} {
    %c0_i32 = arith.constant 0 : i32
    %0 = arith.cmpi eq, %arg1, %c0_i32 : i32
    %1 = arith.extui %0 : i1 to i32
    %c0_i32_0 = arith.constant 0 : i32
    %2 = arith.cmpi ne, %1, %c0_i32_0 : i32
    scf.if %2 {
      %cst_24 = arith.constant 0.000000e+00 : f32
      %37 = vector.broadcast %cst_24 : f32 to vector<1x2x8x128xf32>
      %c0_25 = arith.constant 0 : index
      %c0_26 = arith.constant 0 : index
      %c0_27 = arith.constant 0 : index
      %c0_28 = arith.constant 0 : index
      %38 = vector.load %arg5[%c0_25, %c0_26, %c0_27, %c0_28] : memref<1x2x8x128xf32, #tpu.memory_space<vmem>>, vector<1x2x8x128xf32>
      tpu.vector_store %arg5[%c0_25, %c0_26, %c0_27, %c0_28], %37 {strides = array<i32>} : memref<1x2x8x128xf32, #tpu.memory_space<vmem>>, vector<1x2x8x128xf32>,
    } else {
    }
    %c0 = arith.constant 0 : index
    %c0_1 = arith.constant 0 : index
    %3 = vector.load %arg2[%c0, %c0_1] : memref<56x128xf32, #tpu.memory_space<vmem>>, vector<56x128xf32>
    %c0_2 = arith.constant 0 : index
    %c0_3 = arith.constant 0 : index
    %4 = vector.load %arg3[%c0_2, %c0_3] : memref<56x128xf32, #tpu.memory_space<vmem>>, vector<56x128xf32>
    %5 = arith.subf %3, %4 : vector<56x128xf32>
    %c0_4 = arith.constant 0 : index
    %c0_5 = arith.constant 0 : index
    %6 = vector.load %arg4[%c0_4, %c0_5] : memref<56x128xf32, #tpu.memory_space<vmem>>, vector<56x128xf32>
    %7 = arith.subf %3, %6 : vector<56x128xf32>
    %8 = arith.mulf %5, %5 : vector<56x128xf32>
    %9 = arith.mulf %7, %7 : vector<56x128xf32>
    %c5_i32 = arith.constant 5 : i32
    %10 = arith.muli %arg0, %c5_i32 : i32
    %11 = arith.addi %10, %arg1 : i32
    %c56_i32 = arith.constant 56 : i32
    %12 = arith.muli %11, %c56_i32 : i32
    %c520_i32 = arith.constant 520 : i32
    %13 = arith.subi %c520_i32, %12 : i32
    %14 = tpu.iota {dimensions = array<i32: 0>} : vector<56x128xi32>
    %15 = vector.broadcast %13 : i32 to vector<56x128xi32>
    %16 = arith.cmpi slt, %14, %15 : vector<56x128xi32>
    %cst = arith.constant 0.000000e+00 : f32
    %17 = vector.broadcast %cst : f32 to vector<56x128xf32>
    %18 = arith.select %16, %8, %17 : vector<56x128xi1>, vector<56x128xf32>
    %cst_6 = arith.constant 0.000000e+00 : f32
    %19 = vector.broadcast %cst_6 : f32 to vector<56x128xf32>
    %20 = arith.select %16, %9, %19 : vector<56x128xi1>, vector<56x128xf32>
    %c0_7 = arith.constant 0 : index
    %c0_8 = arith.constant 0 : index
    %c0_9 = arith.constant 0 : index
    %c0_10 = arith.constant 0 : index
    %21 = vector.load %arg5[%c0_7, %c0_8, %c0_9, %c0_10] : memref<1x2x8x128xf32, #tpu.memory_space<vmem>>, vector<1x1x8x128xf32>
    %22 = vector.shape_cast %21 : vector<1x1x8x128xf32> to vector<8x128xf32>
    %23 = vector.shape_cast %18 : vector<56x128xf32> to vector<7x8x128xf32>
    %cst_11 = arith.constant dense<0.000000e+00> : vector<8x128xf32>
    %24 = vector.multi_reduction <add>, %23, %cst_11 [0] : vector<7x8x128xf32> to vector<8x128xf32>
    %25 = arith.addf %22, %24 : vector<8x128xf32>
    %c0_12 = arith.constant 0 : index
    %c0_13 = arith.constant 0 : index
    %c0_14 = arith.constant 0 : index
    %c0_15 = arith.constant 0 : index
    %26 = vector.load %arg5[%c0_12, %c0_13, %c0_14, %c0_15] : memref<1x2x8x128xf32, #tpu.memory_space<vmem>>, vector<1x1x8x128xf32>
    %27 = vector.shape_cast %26 : vector<1x1x8x128xf32> to vector<8x128xf32>
    %28 = vector.shape_cast %25 : vector<8x128xf32> to vector<1x1x8x128xf32>
    tpu.vector_store %arg5[%c0_12, %c0_13, %c0_14, %c0_15], %28 {strides = array<i32>} : memref<1x2x8x128xf32, #tpu.memory_space<vmem>>, vector<1x1x8x128xf32>,
    %c0_16 = arith.constant 0 : index
    %c1 = arith.constant 1 : index
    %c0_17 = arith.constant 0 : index
    %c0_18 = arith.constant 0 : index
    %29 = vector.load %arg5[%c0_16, %c1, %c0_17, %c0_18] : memref<1x2x8x128xf32, #tpu.memory_space<vmem>>, vector<1x1x8x128xf32>
    %30 = vector.shape_cast %29 : vector<1x1x8x128xf32> to vector<8x128xf32>
    %31 = vector.shape_cast %20 : vector<56x128xf32> to vector<7x8x128xf32>
    %cst_19 = arith.constant dense<0.000000e+00> : vector<8x128xf32>
    %32 = vector.multi_reduction <add>, %31, %cst_19 [0] : vector<7x8x128xf32> to vector<8x128xf32>
    %33 = arith.addf %30, %32 : vector<8x128xf32>
    %c0_20 = arith.constant 0 : index
    %c1_21 = arith.constant 1 : index
    %c0_22 = arith.constant 0 : index
    %c0_23 = arith.constant 0 : index
    %34 = vector.load %arg5[%c0_20, %c1_21, %c0_22, %c0_23] : memref<1x2x8x128xf32, #tpu.memory_space<vmem>>, vector<1x1x8x128xf32>
    %35 = vector.shape_cast %34 : vector<1x1x8x128xf32> to vector<8x128xf32>
    %36 = vector.shape_cast %33 : vector<8x128xf32> to vector<1x1x8x128xf32>
    tpu.vector_store %arg5[%c0_20, %c1_21, %c0_22, %c0_23], %36 {strides = array<i32>} : memref<1x2x8x128xf32, #tpu.memory_space<vmem>>, vector<1x1x8x128xf32>,
    return
  }
  func.func @transform_0(%arg0: i32, %arg1: i32) -> (i32, i32) {
    %c5_i32 = arith.constant 5 : i32
    %0 = arith.muli %arg0, %c5_i32 : i32
    %1 = arith.addi %0, %arg1 : i32
    %c9_i32 = arith.constant 9 : i32
    %2 = arith.minsi %1, %c9_i32 : i32
    %c0_i32 = arith.constant 0 : i32
    %c0_i32_0 = arith.constant 0 : i32
    return %2, %c0_i32 : i32, i32
  }
  func.func @transform_1(%arg0: i32, %arg1: i32) -> (i32, i32) {
    %c5_i32 = arith.constant 5 : i32
    %0 = arith.muli %arg0, %c5_i32 : i32
    %1 = arith.addi %0, %arg1 : i32
    %c9_i32 = arith.constant 9 : i32
    %2 = arith.minsi %1, %c9_i32 : i32
    %c0_i32 = arith.constant 0 : i32
    %c0_i32_0 = arith.constant 0 : i32
    return %2, %c0_i32 : i32, i32
  }
  func.func @transform_2(%arg0: i32, %arg1: i32) -> (i32, i32) {
    %c5_i32 = arith.constant 5 : i32
    %0 = arith.muli %arg0, %c5_i32 : i32
    %1 = arith.addi %0, %arg1 : i32
    %c9_i32 = arith.constant 9 : i32
    %2 = arith.minsi %1, %c9_i32 : i32
    %c0_i32 = arith.constant 0 : i32
    %c0_i32_0 = arith.constant 0 : i32
    return %2, %c0_i32 : i32, i32
  }
  func.func @transform_3(%arg0: i32, %arg1: i32) -> (i32, i32, i32, i32) {
    %c0_i32 = arith.constant 0 : i32
    %c0_i32_0 = arith.constant 0 : i32
    %c0_i32_1 = arith.constant 0 : i32
    %c0_i32_2 = arith.constant 0 : i32
    return %arg0, %c0_i32, %c0_i32_0, %c0_i32_1 : i32, i32, i32, i32
  }
}

</mosaic_0001>

<llo_original>
// kernel: tpu_custom_call.1
$region0: #{tpu_custom_call.1}
  #allocation0 [shape = 'u32[]', space=smem, size = 0x4, offset = 0x4, fixed_abs, tag = 'smem constant byte address 0x4 - core index']
  #allocation1 [shape = 'u32[144,128]{1,0:T(1,128)}', space=vmem, size = 0x12000, scoped, tag = 'internal scratch']
  %s0 = inlined_call_operand.hbm [shape: f32[520,128], index: 0, kind: input, shape index: {}]
  %s1 = inlined_call_operand.hbm [shape: f32[520,128], index: 1, kind: input, shape index: {}]
  %s2 = inlined_call_operand.hbm [shape: f32[520,128], index: 2, kind: input, shape index: {}]
  %s3 = inlined_call_operand.hbm [shape: f32[2,2,8,128], index: 3, kind: output, shape index: {}]
  %s4 = sld [smem:[#allocation0]]
  $region61: #{tpu_custom_call.1} parent=0
    _
  %s6 = ssub.s32 1, %s4
  %s7 = scalar_select 0, %s6, %s4
  $region1: #{tpu_custom_call.1} parent=0
    #allocation2 [shape = 'u8[57344]{0}', space=vmem, size = 0xe000, scoped, tag = 'input window, operand 0']
    #allocation3 [shape = 's32[2]{0}', space=sflag, size = 0x8, scoped, tag = 'scoped memory for tpu_custom_call.1']
    #allocation4 [shape = 's32[2]{0}', space=sflag, size = 0x8, scoped, tag = 'scoped memory for tpu_custom_call.1']
    #allocation5 [shape = 'u8[57344]{0}', space=vmem, size = 0xe000, scoped, tag = 'input window, operand 1']
    #allocation6 [shape = 's32[2]{0}', space=sflag, size = 0x8, scoped, tag = 'scoped memory for tpu_custom_call.1']
    #allocation7 [shape = 'u8[57344]{0}', space=vmem, size = 0xe000, scoped, tag = 'input window, operand 2']
    #allocation8 [shape = 'u8[16384]{0}', space=vmem, size = 0x4000, scoped, tag = 'output window, operand 0']
    %8 = vsyncpa [#allocation3], 0
    %s9 = scalar_lea.sflag [#allocation3], 1
    %10 = vsyncpa %s9, 0
    %11 = vsyncpa [#allocation6], 0
    %s12 = scalar_lea.sflag [#allocation6], 1
    %13 = vsyncpa %s12, 0
    %14 = vsyncpa [#allocation4], 0
    %s15 = scalar_lea.sflag [#allocation4], 1
    %16 = vsyncpa %s15, 0
    loop: start=0, step=1, limit=12
    $region2: #{tpu_custom_call.1} parent=1 // loop_pre_header
      _
    $region3: #{tpu_custom_call.1} parent=1 // loop_header
      %s18 = sphi 0, %s22
      %p19 = scmp.ge.s32.totalorder %s18, 12
      %s25 = sphi 0, %s37
      %s26 = sphi 0, %s33
      %s27 = sphi 0, %s25
      %s28 = sphi 0, %s26
      %s29 = sphi 0, %s27
      %s30 = sphi 0, %s28
      %s48 = sphi 0, %s50
      %s51 = sphi 0, %s48
      %s52 = sphi 0, %s51
      %s68 = sphi 0, %s52
      %s82 = sphi 0, %s84
      %s85 = sphi 0, %s82
      %s86 = sphi 0, %s85
      %s102 = sphi 0, %s86
      %s116 = sphi 0, %s118
      %s119 = sphi 0, %s116
      %s120 = sphi 0, %s119
      %s136 = sphi 0, %s120
      %s142 = sphi 0, %s144
      %s145 = sphi 0, %s142
      %s146 = sphi 0, %s145
      %s162 = sphi 0, %s146
    $region4: #{tpu_custom_call.1} parent=1 // loop_header_branch
      %21 = sbr.rel (%p19) target = $region8
    $region5: #{tpu_custom_call.1} parent=1 // loop_body
      %s23 = ssub.s32 %s18, 1
      %s24 = ssub.s32 %s18, 2
      %s31 = sadd.s32 1, %s26
      %p32 = scmp.ge.s32.totalorder %s31, 5
      %s33 = scalar_select %p32, 0, %s31
      %s34 = sadd.s32 1, %s25
      %s35 = scalar_select %p32, %s34, %s25
      %p36 = scmp.ge.s32.totalorder %s35, 2
      %s37 = scalar_select %p36, 0, %s35
      %s38 = smul.u32 %s25, 5
      %s39 = sadd.s32 %s38, %s26
      %p40 = scmp.lt.s32.totalorder %s39, 9
      %s41 = scalar_select %p40, %s39, 9
      %s42 = smul.u32 %s37, 5
      %s43 = sadd.s32 %s42, %s33
      %p44 = scmp.lt.s32.totalorder %s43, 9
      %s45 = scalar_select %p44, %s43, 9
      %s46 = ssub.s32 %s41, %s45
      %p47 = scmp.eq.s32.totalorder %s46, 0
      %s49 = sadd.s32 %s48, 1
      %s50 = scalar_select %p47, %s48, %s49
      %p53 = pneg %p47
      %p54 = scmp.eq.s32.totalorder %s18, 9
      %p55 = por %p53, %p54
      %p56 = scmp.ne.s32.totalorder %s48, %s51
      %p57 = scmp.eq.s32.totalorder %s18, 0
      %p58 = por %p56, %p57
      %p59 = scmp.ne.s32.totalorder %s48, %s51
      %p60 = scmp.eq.s32.totalorder %s23, 9
      %p61 = por %p59, %p60
      %p62 = scmp.ne.s32.totalorder %s51, %s52
      %p63 = scmp.eq.s32.totalorder %s23, 0
      %p64 = por %p62, %p63
      %p65 = scmp.ne.s32.totalorder %s51, %s52
      %p66 = scmp.eq.s32.totalorder %s24, 9
      %p67 = por %p65, %p66
      %p69 = scmp.ne.s32.totalorder %s52, %s68
      %p70 = scmp.eq.s32.totalorder %s24, 0
      %p71 = por %p69, %p70
      %s72 = smul.u32 %s25, 5
      %s73 = sadd.s32 %s72, %s26
      %p74 = scmp.lt.s32.totalorder %s73, 9
      %s75 = scalar_select %p74, %s73, 9
      %s76 = smul.u32 %s37, 5
      %s77 = sadd.s32 %s76, %s33
      %p78 = scmp.lt.s32.totalorder %s77, 9
      %s79 = scalar_select %p78, %s77, 9
      %s80 = ssub.s32 %s75, %s79
      %p81 = scmp.eq.s32.totalorder %s80, 0
      %s83 = sadd.s32 %s82, 1
      %s84 = scalar_select %p81, %s82, %s83
      %p87 = pneg %p81
      %p88 = scmp.eq.s32.totalorder %s18, 9
      %p89 = por %p87, %p88
      %p90 = scmp.ne.s32.totalorder %s82, %s85
      %p91 = scmp.eq.s32.totalorder %s18, 0
      %p92 = por %p90, %p91
      %p93 = scmp.ne.s32.totalorder %s82, %s85
      %p94 = scmp.eq.s32.totalorder %s23, 9
      %p95 = por %p93, %p94
      %p96 = scmp.ne.s32.totalorder %s85, %s86
      %p97 = scmp.eq.s32.totalorder %s23, 0
      %p98 = por %p96, %p97
      %p99 = scmp.ne.s32.totalorder %s85, %s86
      %p100 = scmp.eq.s32.totalorder %s24, 9
      %p101 = por %p99, %p100
      %p103 = scmp.ne.s32.totalorder %s86, %s102
      %p104 = scmp.eq.s32.totalorder %s24, 0
      %p105 = por %p103, %p104
      %s106 = smul.u32 %s25, 5
      %s107 = sadd.s32 %s106, %s26
      %p108 = scmp.lt.s32.totalorder %s107, 9
      %s109 = scalar_select %p108, %s107, 9
      %s110 = smul.u32 %s37, 5
      %s111 = sadd.s32 %s110, %s33
      %p112 = scmp.lt.s32.totalorder %s111, 9
      %s113 = scalar_select %p112, %s111, 9
      %s114 = ssub.s32 %s109, %s113
      %p115 = scmp.eq.s32.totalorder %s114, 0
      %s117 = sadd.s32 %s116, 1
      %s118 = scalar_select %p115, %s116, %s117
      %p121 = pneg %p115
      %p122 = scmp.eq.s32.totalorder %s18, 9
      %p123 = por %p121, %p122
      %p124 = scmp.ne.s32.totalorder %s116, %s119
      %p125 = scmp.eq.s32.totalorder %s18, 0
      %p126 = por %p124, %p125
      %p127 = scmp.ne.s32.totalorder %s116, %s119
      %p128 = scmp.eq.s32.totalorder %s23, 9
      %p129 = por %p127, %p128
      %p130 = scmp.ne.s32.totalorder %s119, %s120
      %p131 = scmp.eq.s32.totalorder %s23, 0
      %p132 = por %p130, %p131
      %p133 = scmp.ne.s32.totalorder %s119, %s120
      %p134 = scmp.eq.s32.totalorder %s24, 9
      %p135 = por %p133, %p134
      %p137 = scmp.ne.s32.totalorder %s120, %s136
      %p138 = scmp.eq.s32.totalorder %s24, 0
      %p139 = por %p137, %p138
      %s140 = ssub.s32 %s25, %s37
      %p141 = scmp.eq.s32.totalorder %s140, 0
      %s143 = sadd.s32 %s142, 1
      %s144 = scalar_select %p141, %s142, %s143
      %p147 = pneg %p141
      %p148 = scmp.eq.s32.totalorder %s18, 9
      %p149 = por %p147, %p148
      %p150 = scmp.ne.s32.totalorder %s142, %s145
      %p151 = scmp.eq.s32.totalorder %s18, 0
      %p152 = por %p150, %p151
      %p153 = scmp.ne.s32.totalorder %s142, %s145
      %p154 = scmp.eq.s32.totalorder %s23, 9
      %p155 = por %p153, %p154
      %p156 = scmp.ne.s32.totalorder %s145, %s146
      %p157 = scmp.eq.s32.totalorder %s23, 0
      %p158 = por %p156, %p157
      %p159 = scmp.ne.s32.totalorder %s145, %s146
      %p160 = scmp.eq.s32.totalorder %s24, 9
      %p161 = por %p159, %p160
      %p163 = scmp.ne.s32.totalorder %s146, %s162
      %p164 = scmp.eq.s32.totalorder %s24, 0
      %p165 = por %p163, %p164
      %p166 = scmp.le.s32.totalorder 1, %s18
      %p167 = scmp.lt.s32.totalorder %s18, 11
      %p168 = pnand %p166, %p167
      %p169 = pneg %p168
      // Predicated region
      $region9: #{tpu_custom_call.1} parent=5 // pred_check
        _
      $region10: #{tpu_custom_call.1} parent=5 // pred_check_branch
        %171 = sbr.rel (%p168) target = $region12
      $region11: #{tpu_custom_call.1} parent=5 // pred_region
        %s172 = ssub.s32 %s18, 1
      $region12: #{tpu_custom_call.1} parent=5 // pred_fallthru
        _
      %p173 = scmp.lt.s32.totalorder %s18, 10
      // Predicated region
      $region13: #{tpu_custom_call.1} parent=5 // pred_check
        %p174 = pneg %p173
      $region14: #{tpu_custom_call.1} parent=5 // pred_check_branch
        %176 = sbr.rel (%p174) target = $region16
      $region15: #{tpu_custom_call.1} parent=5 // pred_region
        // Predicated region
        $region17: #{tpu_custom_call.1} parent=15 // pred_check
          %p177 = pneg %p58
        $region18: #{tpu_custom_call.1} parent=15 // pred_check_branch
          %179 = sbr.rel (%p177) target = $region20
        $region19: #{tpu_custom_call.1} parent=15 // pred_region
          %s180 = sand.u32 %s48, 1
          %s181 = scalar_lea.sflag [#allocation3], %s180
          %s182 = sand.u32 %s48, 1
          %s183 = smul.addr %s182, 56
          %s184 = scalar_lea.vmem [#allocation2], %s183
          %s185 = smul.u32 %s25, 5
          %s186 = sadd.s32 %s185, %s26
          %p187 = scmp.lt.s32.totalorder %s186, 9
          %s188 = scalar_select %p187, %s186, 9
          %s189 = smul.u32 7, %s188
          %s190 = ssub.s32 65, %s189
          %p191 = scmp.lt.s32.totalorder %s190, 7
          %s192 = scalar_select %p191, %s190, 7
          %s193 = smul.u32 128, %s192
          %s195 = ssub.s32 896, %s193
          %196 = vsyncadd %s181, %s195
          %p197 = scmp.ne.s32.totalorder 0, %s193
          %s198 = smul.addr %s189, 128
          %s199 = scalar_lea.hbm %s0, %s198
          %s200 = smul.u32 8, %s192
          %s201 = sshll.u32 %s184, 4
          %s202 = int_to_ptr.vmem [resolvable:$true] %s201
          %s203 = sshll.u32 %s200, 4
          %207 = dma.hbm_to_vmem [thread:$0]  (%p197), %s199, %s203, %s202, %s181, 128, 128, 8
        $region20: #{tpu_custom_call.1} parent=15 // pred_fallthru
          _
        // Predicated region
        $region21: #{tpu_custom_call.1} parent=15 // pred_check
          %p208 = pneg %p92
        $region22: #{tpu_custom_call.1} parent=15 // pred_check_branch
          %210 = sbr.rel (%p208) target = $region24
        $region23: #{tpu_custom_call.1} parent=15 // pred_region
          %s211 = sand.u32 %s18, 1
          %s212 = scalar_lea.sflag [#allocation6], %s211
          %s213 = sand.u32 %s82, 1
          %s214 = smul.addr %s213, 56
          %s215 = scalar_lea.vmem [#allocation5], %s214
          %s216 = smul.u32 %s25, 5
          %s217 = sadd.s32 %s216, %s26
          %p218 = scmp.lt.s32.totalorder %s217, 9
          %s219 = scalar_select %p218, %s217, 9
          %s220 = smul.u32 7, %s219
          %s221 = ssub.s32 65, %s220
          %p222 = scmp.lt.s32.totalorder %s221, 7
          %s223 = scalar_select %p222, %s221, 7
          %s224 = smul.u32 128, %s223
          %s226 = ssub.s32 896, %s224
          %227 = vsyncadd %s212, %s226
          %p228 = scmp.ne.s32.totalorder 0, %s224
          %s229 = smul.addr %s220, 128
          %s230 = scalar_lea.hbm %s1, %s229
          %s231 = smul.u32 8, %s223
          %s232 = sshll.u32 %s215, 4
          %s233 = int_to_ptr.vmem [resolvable:$true] %s232
          %s234 = sshll.u32 %s231, 4
          %238 = dma.hbm_to_vmem [thread:$0]  (%p228), %s230, %s234, %s233, %s212, 128, 128, 8
        $region24: #{tpu_custom_call.1} parent=15 // pred_fallthru
          _
        // Predicated region
        $region25: #{tpu_custom_call.1} parent=15 // pred_check
          %p239 = pneg %p126
        $region26: #{tpu_custom_call.1} parent=15 // pred_check_branch
          %241 = sbr.rel (%p239) target = $region28
        $region27: #{tpu_custom_call.1} parent=15 // pred_region
          %s242 = sand.u32 %s18, 1
          %s243 = scalar_lea.sflag [#allocation6], %s242
          %s244 = sand.u32 %s116, 1
          %s245 = smul.addr %s244, 56
          %s246 = scalar_lea.vmem [#allocation7], %s245
          %s247 = smul.u32 %s25, 5
          %s248 = sadd.s32 %s247, %s26
          %p249 = scmp.lt.s32.totalorder %s248, 9
          %s250 = scalar_select %p249, %s248, 9
          %s251 = smul.u32 7, %s250
          %s252 = ssub.s32 65, %s251
          %p253 = scmp.lt.s32.totalorder %s252, 7
          %s254 = scalar_select %p253, %s252, 7
          %s255 = smul.u32 128, %s254
          %s257 = ssub.s32 896, %s255
          %258 = vsyncadd %s243, %s257
          %p259 = scmp.ne.s32.totalorder 0, %s255
          %s260 = smul.addr %s251, 128
          %s261 = scalar_lea.hbm %s2, %s260
          %s262 = smul.u32 8, %s254
          %s263 = sshll.u32 %s246, 4
          %s264 = int_to_ptr.vmem [resolvable:$true] %s263
          %s265 = sshll.u32 %s262, 4
          %269 = dma.hbm_to_vmem [thread:$0]  (%p259), %s261, %s265, %s264, %s243, 128, 128, 8
        $region28: #{tpu_custom_call.1} parent=15 // pred_fallthru
          _
      $region16: #{tpu_custom_call.1} parent=5 // pred_fallthru
        _
      %p270 = scmp.le.s32.totalorder 1, %s18
      %p271 = scmp.lt.s32.totalorder %s18, 11
      %p272 = pnand %p270, %p271
      %p273 = pneg %p272
      // Predicated region
      $region29: #{tpu_custom_call.1} parent=5 // pred_check
        _
      $region30: #{tpu_custom_call.1} parent=5 // pred_check_branch
        %275 = sbr.rel (%p272) target = $region32
      $region31: #{tpu_custom_call.1} parent=5 // pred_region
        %s276 = ssub.s32 %s18, 1
        %s277 = sand.u32 %s51, 1
        %s278 = scalar_lea.sflag [#allocation3], %s277
        %s279 = sand.u32 %s51, 1
        %s280 = smul.addr %s279, 56
        %s281 = scalar_lea.vmem [#allocation2], %s280
        // Predicated region
        $region33: #{tpu_custom_call.1} parent=31 // pred_check
          %p282 = pneg %p64
        $region34: #{tpu_custom_call.1} parent=31 // pred_check_branch
          %284 = sbr.rel (%p282) target = $region36
        $region35: #{tpu_custom_call.1} parent=31 // pred_region
          %285 = dma.done %s278, 896
        $region36: #{tpu_custom_call.1} parent=31 // pred_fallthru
          _
        %s286 = sand.u32 %s23, 1
        %s287 = scalar_lea.sflag [#allocation6], %s286
        %s288 = sand.u32 %s85, 1
        %s289 = smul.addr %s288, 56
        %s290 = scalar_lea.vmem [#allocation5], %s289
        // Predicated region
        $region37: #{tpu_custom_call.1} parent=31 // pred_check
          %p291 = pneg %p98
        $region38: #{tpu_custom_call.1} parent=31 // pred_check_branch
          %293 = sbr.rel (%p291) target = $region40
        $region39: #{tpu_custom_call.1} parent=31 // pred_region
          %294 = dma.done %s287, 896
        $region40: #{tpu_custom_call.1} parent=31 // pred_fallthru
          _
        %s295 = sand.u32 %s23, 1
        %s296 = scalar_lea.sflag [#allocation6], %s295
        %s297 = sand.u32 %s119, 1
        %s298 = smul.addr %s297, 56
        %s299 = scalar_lea.vmem [#allocation7], %s298
        // Predicated region
        $region41: #{tpu_custom_call.1} parent=31 // pred_check
          %p300 = pneg %p132
        $region42: #{tpu_custom_call.1} parent=31 // pred_check_branch
          %302 = sbr.rel (%p300) target = $region44
        $region43: #{tpu_custom_call.1} parent=31 // pred_region
          %303 = dma.done %s296, 896
        $region44: #{tpu_custom_call.1} parent=31 // pred_fallthru
          _
        %s304 = sand.u32 %s51, 1
        %s305 = scalar_lea.sflag [#allocation3], %s304
        %s306 = sand.u32 %s51, 1
        %s307 = smul.addr %s306, 56
        %s308 = scalar_lea.vmem [#allocation2], %s307
        %p309 = pneg %p64
        %p310 = pneg %p61
        %s311 = sand.u32 %s23, 1
        %s312 = scalar_lea.sflag [#allocation6], %s311
        %s313 = sand.u32 %s85, 1
        %s314 = smul.addr %s313, 56
        %s315 = scalar_lea.vmem [#allocation5], %s314
        %p316 = pneg %p98
        %p317 = pneg %p95
        %s318 = sand.u32 %s23, 1
        %s319 = scalar_lea.sflag [#allocation6], %s318
        %s320 = sand.u32 %s119, 1
        %s321 = smul.addr %s320, 56
        %s322 = scalar_lea.vmem [#allocation7], %s321
        %p323 = pneg %p132
        %p324 = pneg %p129
        %p325 = pneg %p158
        %p326 = pneg %p155
        %s327 = sand.u32 %s145, 1
        %s328 = scalar_lea.sflag [#allocation4], %s327
        %s329 = sand.u32 %s145, 1
        %s330 = smul.addr %s329, 16
        %s331 = scalar_lea.vmem [#allocation8], %s330
        %s332 = smul.u32 %s27, 5
        %s333 = sadd.s32 %s332, %s28
        %p334 = scmp.lt.s32.totalorder %s333, 9
        %s335 = scalar_select %p334, %s333, 9
        %s336 = smul.u32 7, %s335
        %s337 = ssub.s32 65, %s336
        %p338 = scmp.lt.s32.totalorder %s337, 7
        %s339 = scalar_select %p338, %s337, 7
        %s340 = smul.u32 128, %s339
        %s341 = smul.u32 %s27, 5
        %s342 = sadd.s32 %s341, %s28
        %p343 = scmp.lt.s32.totalorder %s342, 9
        %s344 = scalar_select %p343, %s342, 9
        %s345 = smul.u32 7, %s344
        %s346 = ssub.s32 65, %s345
        %p347 = scmp.lt.s32.totalorder %s346, 7
        %s348 = scalar_select %p347, %s346, 7
        %s349 = smul.u32 128, %s348
        %s350 = smul.u32 %s27, 5
        %s351 = sadd.s32 %s350, %s28
        %p352 = scmp.lt.s32.totalorder %s351, 9
        %s353 = scalar_select %p352, %s351, 9
        %s354 = smul.u32 7, %s353
        %s355 = ssub.s32 65, %s354
        %p356 = scmp.lt.s32.totalorder %s355, 7
        %s357 = scalar_select %p356, %s355, 7
        %s358 = smul.u32 128, %s357
        %p359 = scmp.eq.s32.totalorder %s28, 0
        // Predicated region
        $region45: #{tpu_custom_call.1} parent=31 // pred_check
          %p360 = pneg %p359
        $region46: #{tpu_custom_call.1} parent=31 // pred_check_branch
          %362 = sbr.rel (%p360) target = $region48
        $region47: #{tpu_custom_call.1} parent=31 // pred_region
          %363 = vst [vmem:[%s331] sm:$0xff] 0.0
          %364 = vst [vmem:[%s331 + $0x8] sm:$0xff] 0.0
        $region48: #{tpu_custom_call.1} parent=31 // pred_fallthru
          _
        %v365 = vld [vmem:[%s281] sm:$0xff]
        %v366 = vld [vmem:[%s281 + $0x8] sm:$0xff]
        %v367 = vld [vmem:[%s281 + $0x10] sm:$0xff]
        %v368 = vld [vmem:[%s281 + $0x18] sm:$0xff]
        %v369 = vld [vmem:[%s281 + $0x20] sm:$0xff]
        %v370 = vld [vmem:[%s281 + $0x28] sm:$0xff]
        %v371 = vld [vmem:[%s281 + $0x30] sm:$0xff]
        %v372 = vld [vmem:[%s290] sm:$0xff]
        %v373 = vld [vmem:[%s290 + $0x8] sm:$0xff]
        %v374 = vld [vmem:[%s290 + $0x10] sm:$0xff]
        %v375 = vld [vmem:[%s290 + $0x18] sm:$0xff]
        %v376 = vld [vmem:[%s290 + $0x20] sm:$0xff]
        %v377 = vld [vmem:[%s290 + $0x28] sm:$0xff]
        %v378 = vld [vmem:[%s290 + $0x30] sm:$0xff]
        %v379 = vsub.f32 %v365, %v372
        %v380 = vsub.f32 %v366, %v373
        %v381 = vsub.f32 %v367, %v374
        %v382 = vsub.f32 %v368, %v375
        %v383 = vsub.f32 %v369, %v376
        %v384 = vsub.f32 %v370, %v377
        %v385 = vsub.f32 %v371, %v378
        %v386 = vld [vmem:[%s299] sm:$0xff]
        %v387 = vld [vmem:[%s299 + $0x8] sm:$0xff]
        %v388 = vld [vmem:[%s299 + $0x10] sm:$0xff]
        %v389 = vld [vmem:[%s299 + $0x18] sm:$0xff]
        %v390 = vld [vmem:[%s299 + $0x20] sm:$0xff]
        %v391 = vld [vmem:[%s299 + $0x28] sm:$0xff]
        %v392 = vld [vmem:[%s299 + $0x30] sm:$0xff]
        %v393 = vsub.f32 %v365, %v386
        %v394 = vsub.f32 %v366, %v387
        %v395 = vsub.f32 %v367, %v388
        %v396 = vsub.f32 %v368, %v389
        %v397 = vsub.f32 %v369, %v390
        %v398 = vsub.f32 %v370, %v391
        %v399 = vsub.f32 %v371, %v392
        %v400 = vmul.f32 %v379, %v379
        %v401 = vmul.f32 %v380, %v380
        %v402 = vmul.f32 %v381, %v381
        %v403 = vmul.f32 %v382, %v382
        %v404 = vmul.f32 %v383, %v383
        %v405 = vmul.f32 %v384, %v384
        %v406 = vmul.f32 %v385, %v385
        %v407 = vmul.f32 %v393, %v393
        %v408 = vmul.f32 %v394, %v394
        %v409 = vmul.f32 %v395, %v395
        %v410 = vmul.f32 %v396, %v396
        %v411 = vmul.f32 %v397, %v397
        %v412 = vmul.f32 %v398, %v398
        %v413 = vmul.f32 %v399, %v399
        %s414 = smul.u32 %s27, 5
        %s415 = sadd.s32 %s414, %s28
        %s416 = smul.u32 %s415, 56
        %s417 = ssub.s32 520, %s416
        %v418 = vlaneseq
        %v419 = vshrl.u32 %v418, 7
        %v420 = vadd.s32 %v419, 8
        %v421 = vadd.s32 %v419, 16
        %v422 = vadd.s32 %v419, 24
        %v423 = vadd.s32 %v419, 32
        %v424 = vadd.s32 %v419, 40
        %v425 = vadd.s32 %v419, 48
        %v426 = vstv %s417
        %vm427 = vcmp.lt.s32.totalorder %v419, %v426
        %vm428 = vcmp.lt.s32.totalorder %v420, %v426
        %vm429 = vcmp.lt.s32.totalorder %v421, %v426
        %vm430 = vcmp.lt.s32.totalorder %v422, %v426
        %vm431 = vcmp.lt.s32.totalorder %v423, %v426
        %vm432 = vcmp.lt.s32.totalorder %v424, %v426
        %vm433 = vcmp.lt.s32.totalorder %v425, %v426
        %v434 = vsel %vm427, %v400, 0.0
        %v435 = vsel %vm428, %v401, 0.0
        %v436 = vsel %vm429, %v402, 0.0
        %v437 = vsel %vm430, %v403, 0.0
        %v438 = vsel %vm431, %v404, 0.0
        %v439 = vsel %vm432, %v405, 0.0
        %v440 = vsel %vm433, %v406, 0.0
        %v441 = vsel %vm427, %v407, 0.0
        %v442 = vsel %vm428, %v408, 0.0
        %v443 = vsel %vm429, %v409, 0.0
        %v444 = vsel %vm430, %v410, 0.0
        %v445 = vsel %vm431, %v411, 0.0
        %v446 = vsel %vm432, %v412, 0.0
        %v447 = vsel %vm433, %v413, 0.0
        %v448 = vld [vmem:[%s331] sm:$0xff]
        %v449 = vadd.f32 %v434, %v435
        %v450 = vadd.f32 %v449, %v436
        %v451 = vadd.f32 %v450, %v437
        %v452 = vadd.f32 %v451, %v438
        %v453 = vadd.f32 %v452, %v439
        %v454 = vadd.f32 %v453, %v440
        %v455 = vadd.f32 %v448, %v454
        %456 = vst [vmem:[%s331] sm:$0xff] %v455
        %s457 = scalar_lea.vmem %s331, 8 [#allocation8]
        %v458 = vld [vmem:[%s457] sm:$0xff]
        %v459 = vadd.f32 %v441, %v442
        %v460 = vadd.f32 %v459, %v443
        %v461 = vadd.f32 %v460, %v444
        %v462 = vadd.f32 %v461, %v445
        %v463 = vadd.f32 %v462, %v446
        %v464 = vadd.f32 %v463, %v447
        %v465 = vadd.f32 %v458, %v464
        %466 = vst [vmem:[%s457] sm:$0xff] %v465
        %s467 = sand.u32 %s145, 1
        %s468 = scalar_lea.sflag [#allocation4], %s467
        %s469 = sand.u32 %s145, 1
        %s470 = smul.addr %s469, 16
        %s471 = scalar_lea.vmem [#allocation8], %s470
        // Predicated region
        $region49: #{tpu_custom_call.1} parent=31 // pred_check
          %p472 = pneg %p155
        $region50: #{tpu_custom_call.1} parent=31 // pred_check_branch
          %474 = sbr.rel (%p472) target = $region52
        $region51: #{tpu_custom_call.1} parent=31 // pred_region
          %s476 = ssub.s32 256, 256
          %477 = vsyncadd %s468, %s476
          %s478 = smul.addr %s27, 2
          %s479 = smul.addr %s478, 128
          %s480 = scalar_lea.hbm %s3, %s479
          %s481 = sshll.u32 %s471, 4
          %s482 = int_to_ptr.vmem [resolvable:$true] %s481
          %487 = dma.vmem_to_hbm [thread:$0]  %s482, 256, %s480, %s468, 128, 128, 8
        $region52: #{tpu_custom_call.1} parent=31 // pred_fallthru
          _
      $region32: #{tpu_custom_call.1} parent=5 // pred_fallthru
        _
      %p488 = scmp.le.s32.totalorder 2, %s18
      // Predicated region
      $region53: #{tpu_custom_call.1} parent=5 // pred_check
        %p489 = pneg %p488
      $region54: #{tpu_custom_call.1} parent=5 // pred_check_branch
        %491 = sbr.rel (%p489) target = $region56
      $region55: #{tpu_custom_call.1} parent=5 // pred_region
        %s492 = ssub.s32 %s18, 2
        // Predicated region
        $region57: #{tpu_custom_call.1} parent=55 // pred_check
          %p493 = pneg %p161
        $region58: #{tpu_custom_call.1} parent=55 // pred_check_branch
          %495 = sbr.rel (%p493) target = $region60
        $region59: #{tpu_custom_call.1} parent=55 // pred_region
          %s496 = sand.u32 %s146, 1
          %s497 = scalar_lea.sflag [#allocation4], %s496
          %s498 = sand.u32 %s146, 1
          %s499 = smul.addr %s498, 16
          %s500 = scalar_lea.vmem [#allocation8], %s499
          %501 = dma.done %s497, 256
        $region60: #{tpu_custom_call.1} parent=55 // pred_fallthru
          _
      $region56: #{tpu_custom_call.1} parent=5 // pred_fallthru
        _
    $region6: #{tpu_custom_call.1} parent=1 // loop_footer
      %s22 = sadd.s32 1, %s18
    $region7: #{tpu_custom_call.1} parent=1 // loop_footer_branch
      %17 = sbr.rel target = $region3
    $region8: #{tpu_custom_call.1} parent=1 // loop_exit
      _
    %502 = vsyncpa [#allocation3], 1
    %s503 = scalar_lea.sflag [#allocation3], 1
    %504 = vsyncpa %s503, 1
    %505 = vsyncpa [#allocation6], 1
    %s506 = scalar_lea.sflag [#allocation6], 1
    %507 = vsyncpa %s506, 1
    %508 = vsyncpa [#allocation4], 1
    %s509 = scalar_lea.sflag [#allocation4], 1
    %510 = vsyncpa %s509, 1

</llo_original>
